<compile_context>
chip_gen: v7x
topology: tpu7x:2x2x1
jax: 0.10.0
libtpu: 0.0.40
codegen_flags: <defaults>
</compile_context>

<pallas_src>
import functools

import jax
import jax.numpy as jnp
from jax.experimental import pallas as pl
from jax.experimental.pallas import tpu as pltpu


def _round_up(x, m):
    return (x + m - 1) // m * m


def _pick_tile(n):
    for c in (1024, 512, 256, 128):
        if n % c == 0:
            return c
    return n


def _resolve_vmem_limit():
    cap = None
    try:
        cap = int(pltpu.get_tpu_info().vmem_capacity_bytes)
    except Exception:
        try:
            kind = jax.devices()[0].device_kind.lower()
            cap = 64 * 2**20 if ("v7" in kind or "7x" in kind) else 128 * 2**20
        except Exception:
            cap = 64 * 2**20
    return min(int(cap * 0.75), 112 * 2**20)


def _device_kind():
    try:
        return jax.devices()[0].device_kind.lower()
    except Exception:
        return ""


_VMEM_LIMIT = _resolve_vmem_limit()
_KIND = _device_kind()
# bf16 VPU/EUP exists on v6e/v7x; keep f32 tanh elsewhere (always correct).
_TANH_BF16_OK = ("v6" in _KIND) or ("v7" in _KIND) or ("7x" in _KIND)
_BUFFERED1_OK = True  # flipped once (module-wide) if lowering rejects pl.Buffered(1)


# ----------------------------------------------------------------------------
# Fused kernel: whole head for one row-tile, weights resident in VMEM.
# ----------------------------------------------------------------------------
def _fused_kernel(x_ref, w1_ref, b1_ref, w2_ref, b2_ref, w3_ref, b3_ref, o_ref,
                  *, n_chunks, tanh_dtype):
    mxu = w1_ref.dtype                       # bf16 (default) or f32
    tm = x_ref.shape[0]
    cm = tm // n_chunks
    # Static unroll over sub-chunks: independent chains let the scheduler overlap
    # chunk-1's MXU matmuls with chunk-0's bias+tanh (VPU/EUP).
    for c in range(n_chunks):
        rows = pl.ds(c * cm, cm)
        x = x_ref[rows, :].astype(mxu)       # in-kernel cast: free VPU filler
        h = jnp.dot(x, w1_ref[...], preferred_element_type=jnp.float32)
        h = jnp.tanh((h + b1_ref[...]).astype(tanh_dtype))
        h = jnp.dot(h.astype(mxu), w2_ref[...], preferred_element_type=jnp.float32)
        h = jnp.tanh((h + b2_ref[...]).astype(tanh_dtype))
        o = jnp.dot(h.astype(mxu), w3_ref[...], preferred_element_type=jnp.float32)
        o_ref[rows, :] = (o + b3_ref[...]).astype(o_ref.dtype)


@functools.partial(
    jax.jit,
    static_argnames=("tm", "n_chunks", "tanh_bf16", "single_buffer_weights"))
def _head_fused(x, w1, b1, w2, b2, w3, b3, *, tm, n_chunks, tanh_bf16,
                single_buffer_weights):
    B, S, D = x.shape
    d_pad = w1.shape[0]
    N = w3.shape[1]
    M = B * S
    m_pad = _round_up(M, tm)
    out_dtype = x.dtype

    # Zero padding is exact: padded x cols are zero, padded weight rows/cols and
    # biases are zero, tanh(0)=0, so padded units never touch real outputs.
    x2d = jnp.pad(x.reshape(M, D), ((0, m_pad - M), (0, d_pad - D)))

    # Grid-invariant weights: single-buffer them (halves resident weight VMEM).
    weight_mode = pl.Buffered(1) if single_buffer_weights else None

    def const_spec(shape):
        return pl.BlockSpec(shape, lambda i: (0, 0), pipeline_mode=weight_mode)

    tanh_dtype = jnp.bfloat16 if tanh_bf16 else jnp.float32
    kernel = functools.partial(_fused_kernel, n_chunks=n_chunks,
                               tanh_dtype=tanh_dtype)

    out2d = pl.pallas_call(
        kernel,
        out_shape=jax.ShapeDtypeStruct((m_pad, N), out_dtype),
        grid_spec=pltpu.PrefetchScalarGridSpec(
            num_scalar_prefetch=0,
            grid=(m_pad // tm,),
            in_specs=[
                pl.BlockSpec((tm, d_pad), lambda i: (i, 0)),  # x row tile
                const_spec((d_pad, d_pad)),                   # w1 (resident)
                const_spec((1, d_pad)),                       # b1
                const_spec((d_pad, d_pad)),                   # w2 (resident)
                const_spec((1, d_pad)),                       # b2
                const_spec((d_pad, N)),                       # w3 (resident, N=400)
                const_spec((1, N)),                           # b3
            ],
            out_specs=pl.BlockSpec((tm, N), lambda i: (i, 0)),  # 400-wide, masked vst
        ),
        compiler_params=pltpu.CompilerParams(
            dimension_semantics=("parallel",),
            vmem_limit_bytes=_VMEM_LIMIT,
        ),
    )(x2d, w1, b1, w2, b2, w3, b3)

    return out2d[:M].reshape(B, S, N)


# ----------------------------------------------------------------------------
# Escape hatch for large d_model: three K/N-tiled linear kernels.
# ----------------------------------------------------------------------------
def _make_linear_kernel(apply_tanh):
    def kernel(x_ref, w_ref, b_ref, o_ref, acc_ref):
        k = pl.program_id(2)

        @pl.when(k == 0)
        def _():
            acc_ref[...] = jnp.zeros_like(acc_ref)

        acc_ref[...] += jnp.dot(x_ref[...].astype(w_ref.dtype), w_ref[...],
                                preferred_element_type=jnp.float32)

        @pl.when(k == pl.num_programs(2) - 1)
        def _():
            r = acc_ref[...] + b_ref[...]
            if apply_tanh:
                r = jnp.tanh(r)
            o_ref[...] = r.astype(o_ref.dtype)

    return kernel


def _linear(x2d, w, b, *, out_dtype, apply_tanh, tm):
    M, K = x2d.shape
    N = w.shape[1]
    tk = _pick_tile(K)
    tn = N if N % 128 != 0 else _pick_tile(N)   # 400 -> full-width block (allowed)
    grid = (M // tm, N // tn, K // tk)
    return pl.pallas_call(
        _make_linear_kernel(apply_tanh),
        out_shape=jax.ShapeDtypeStruct((M, N), out_dtype),
        grid_spec=pltpu.PrefetchScalarGridSpec(
            num_scalar_prefetch=0,
            grid=grid,
            in_specs=[
                pl.BlockSpec((tm, tk), lambda i, j, k: (i, k)),
                pl.BlockSpec((tk, tn), lambda i, j, k: (k, j)),
                pl.BlockSpec((1, tn), lambda i, j, k: (0, j)),
            ],
            out_specs=pl.BlockSpec((tm, tn), lambda i, j, k: (i, j)),
            scratch_shapes=[pltpu.VMEM((tm, tn), jnp.float32)],
        ),
        compiler_params=pltpu.CompilerParams(
            dimension_semantics=("parallel", "parallel", "arbitrary"),
            vmem_limit_bytes=_VMEM_LIMIT,
        ),
    )(x2d, w, b)


@functools.partial(jax.jit, static_argnames=("tm",))
def _head_layered(x, w1, b1, w2, b2, w3, b3, *, tm):
    B, S, D = x.shape
    d_pad = w1.shape[0]
    N = w3.shape[1]
    M = B * S
    m_pad = _round_up(M, tm)
    x2d = jnp.pad(x.reshape(M, D), ((0, m_pad - M), (0, d_pad - D)))
    inter_dtype = w1.dtype
    h = _linear(x2d, w1, b1, out_dtype=inter_dtype, apply_tanh=True, tm=tm)
    h = _linear(h, w2, b2, out_dtype=inter_dtype, apply_tanh=True, tm=tm)
    o = _linear(h, w3, b3, out_dtype=x.dtype, apply_tanh=False, tm=tm)
    return o[:M].reshape(B, S, N)


# ----------------------------------------------------------------------------
# Public API
# ----------------------------------------------------------------------------
def prepare_params(params, *, use_bf16=True):
    """One-time pad + (optional) bf16 cast of the head parameters.

    The HBM pass over the weights happens here, not on every forward call.
    Weights are stored [in, out] (transpose of nn.Linear.weight).
    """
    D = params["w1"].shape[0]
    N = params["w3"].shape[1]
    d_pad = _round_up(D, 128)
    wdt = jnp.bfloat16 if use_bf16 else jnp.float32

    def pad_w(w, n_out):
        return jnp.pad(w, ((0, d_pad - D), (0, n_out - w.shape[1]))).astype(wdt)

    def pad_b(b, n_out):
        return jnp.pad(b, (0, n_out - b.shape[0])).reshape(1, n_out).astype(jnp.float32)

    return {
        "w1": pad_w(params["w1"], d_pad), "b1": pad_b(params["b1"], d_pad),
        "w2": pad_w(params["w2"], d_pad), "b2": pad_b(params["b2"], d_pad),
        "w3": pad_w(params["w3"], N),     "b3": pad_b(params["b3"], N),
    }


def t5_classification_head(hidden_states, prepared_params, *, tile_m=512,
                           force_layered=False):
    """hidden_states: [B, S, D]; prepared_params: output of prepare_params()."""
    global _BUFFERED1_OK
    p = prepared_params
    B, S, D = hidden_states.shape
    d_pad = p["w1"].shape[0]
    N = p["w3"].shape[1]
    M = B * S

    # Row tile: multiple of 8; cap so the grid has >=2 steps when possible
    # (v7x megacore gets both TensorCores busy; negligible cost on v5e/v6e).
    m_rows = _round_up(max(M, 1), 8)
    tm = min(_round_up(tile_m, 8), m_rows)
    if m_rows > 8:
        tm = min(tm, _round_up((m_rows + 1) // 2, 8))
    tm = max(8, tm)
    n_chunks = 2 if (tm >= 256 and tm % 16 == 0) else 1

    # Resident-weight VMEM estimate (single-buffered weights + double-buffered x/out).
    wbytes = jnp.dtype(p["w1"].dtype).itemsize
    xbytes = jnp.dtype(hidden_states.dtype).itemsize
    n_lane = _round_up(N, 128)
    resident = (2 * d_pad * d_pad + d_pad * n_lane) * wbytes + (2 * d_pad + n_lane) * 4
    io = 2 * (tm * d_pad * xbytes + tm * n_lane * xbytes)
    fits = (resident + io) <= int(0.8 * _VMEM_LIMIT)

    tanh_bf16 = (p["w1"].dtype == jnp.bfloat16) and _TANH_BF16_OK
    args = (hidden_states, p["w1"], p["b1"], p["w2"], p["b2"], p["w3"], p["b3"])

    if force_layered or not fits:
        # Large-D escape hatch: K/N-tiled per-layer kernels (weights streamed).
        return _head_layered(*args, tm=tm)

    if _BUFFERED1_OK:
        try:
            return _head_fused(*args, tm=tm, n_chunks=n_chunks,
                               tanh_bf16=tanh_bf16, single_buffer_weights=True)
        except pltpu.LoweringException:
            _BUFFERED1_OK = False  # resolve capability once; never retried per call
    return _head_fused(*args, tm=tm, n_chunks=n_chunks, tanh_bf16=tanh_bf16,
                       single_buffer_weights=False)


def init_params(key, d_model, n_actions=400):
    """PyTorch-Linear-style init (uniform +-1/sqrt(fan_in)); weights [in, out]."""
    k1, k2, k3, k4, k5, k6 = jax.random.split(key, 6)
    bound = 1.0 / jnp.sqrt(d_model)
    return {
        "w1": jax.random.uniform(k1, (d_model, d_model), jnp.float32, -bound, bound),
        "b1": jax.random.uniform(k2, (d_model,), jnp.float32, -bound, bound),
        "w2": jax.random.uniform(k3, (d_model, d_model), jnp.float32, -bound, bound),
        "b2": jax.random.uniform(k4, (d_model,), jnp.float32, -bound, bound),
        "w3": jax.random.uniform(k5, (d_model, n_actions), jnp.float32, -bound, bound),
        "b3": jax.random.uniform(k6, (n_actions,), jnp.float32, -bound, bound),
    }


def _reference(hidden_states, params):
    h = jnp.tanh(hidden_states @ params["w1"] + params["b1"])
    h = jnp.tanh(h @ params["w2"] + params["b2"])
    return h @ params["w3"] + params["b3"]


if __name__ == "__main__":
    key = jax.random.PRNGKey(0)
    k_x, k_p, k_x2, k_x3 = jax.random.split(key, 4)

    B, S, D = 2, 8, 32  # small demo shapes; d_model=32, 400 output logits
    x = jax.random.normal(k_x, (B, S, D), dtype=jnp.float32)
    params = init_params(k_p, D, 400)
    ref = _reference(x, params)

    # Default bf16-MXU fused path (weights prepared/cast once).
    prep_bf16 = prepare_params(params, use_bf16=True)
    out = jax.block_until_ready(t5_classification_head(x, prep_bf16))
    assert out.shape == (B, S, 400), out.shape
    assert jnp.allclose(out, ref, atol=3e-2, rtol=3e-2), "bf16 kernel mismatch"

    # f32 fused path, tight tolerance.
    prep_f32 = prepare_params(params, use_bf16=False)
    out_f32 = jax.block_until_ready(t5_classification_head(x, prep_f32))
    assert jnp.allclose(out_f32, ref, atol=1e-4, rtol=1e-4), "f32 kernel mismatch"

    # Odd shapes -> internal row padding + multi-step grid (M=15 -> 2 tiles of 8).
    x_odd = jax.random.normal(k_x2, (3, 5, D), dtype=jnp.float32)
    out_odd = jax.block_until_ready(
        t5_classification_head(x_odd, prep_f32, tile_m=8))
    assert out_odd.shape == (3, 5, 400), out_odd.shape
    assert jnp.allclose(out_odd, _reference(x_odd, params), atol=1e-4, rtol=1e-4), \
        "tiled kernel mismatch"

    # Larger M -> tm=256, 2 grid steps + 2-chunk in-kernel pipelining.
    x_big = jax.random.normal(k_x3, (8, 64, D), dtype=jnp.float32)
    out_big = jax.block_until_ready(t5_classification_head(x_big, prep_bf16))
    assert jnp.allclose(out_big, _reference(x_big, params), atol=3e-2, rtol=3e-2), \
        "chunked kernel mismatch"

    # Large-D escape-hatch (K/N-tiled layered) path, forced for testing.
    out_lay = jax.block_until_ready(
        t5_classification_head(x, prep_f32, force_layered=True))
    assert jnp.allclose(out_lay, ref, atol=1e-4, rtol=1e-4), "layered kernel mismatch"

    print("KERNEL_OK")
</pallas_src>

<mosaic_0001>
module attributes {stable_mosaic.version = 11 : i64} {
  func.func @_fused_kernel(%arg0: i32, %arg1: memref<8x128xf32, #tpu.memory_space<vmem>>, %arg2: memref<128x128xbf16, #tpu.memory_space<vmem>>, %arg3: memref<1x128xf32, #tpu.memory_space<vmem>>, %arg4: memref<128x128xbf16, #tpu.memory_space<vmem>>, %arg5: memref<1x128xf32, #tpu.memory_space<vmem>>, %arg6: memref<128x400xbf16, #tpu.memory_space<vmem>>, %arg7: memref<1x400xf32, #tpu.memory_space<vmem>>, %arg8: memref<8x400xf32, #tpu.memory_space<vmem>>) attributes {dimension_semantics = [#tpu.dimension_semantics<parallel>], iteration_bounds = array<i64: 2>, scalar_prefetch = 0 : i64, scratch_operands = 0 : i64, tpu.core_type = #tpu.core_type<tc>, window_params = [{transform_indices = @transform_0, window_bounds = array<i64: 8, 128>}, {pipeline_mode = #tpu.pipeline_mode<synchronous>, transform_indices = @transform_1, window_bounds = array<i64: 128, 128>}, {pipeline_mode = #tpu.pipeline_mode<synchronous>, transform_indices = @transform_2, window_bounds = array<i64: 1, 128>}, {pipeline_mode = #tpu.pipeline_mode<synchronous>, transform_indices = @transform_3, window_bounds = array<i64: 128, 128>}, {pipeline_mode = #tpu.pipeline_mode<synchronous>, transform_indices = @transform_4, window_bounds = array<i64: 1, 128>}, {pipeline_mode = #tpu.pipeline_mode<synchronous>, transform_indices = @transform_5, window_bounds = array<i64: 128, 400>}, {pipeline_mode = #tpu.pipeline_mode<synchronous>, transform_indices = @transform_6, window_bounds = array<i64: 1, 400>}, {transform_indices = @transform_7, window_bounds = array<i64: 8, 400>}]} {
    %c0 = arith.constant 0 : index
    %c0_0 = arith.constant 0 : index
    %0 = vector.load %arg1[%c0, %c0_0] : memref<8x128xf32, #tpu.memory_space<vmem>>, vector<8x128xf32>
    %1 = arith.truncf %0 : vector<8x128xf32> to vector<8x128xbf16>
    %c0_1 = arith.constant 0 : index
    %c0_2 = arith.constant 0 : index
    %2 = vector.load %arg2[%c0_1, %c0_2] : memref<128x128xbf16, #tpu.memory_space<vmem>>, vector<128x128xbf16>
    %cst = arith.constant dense<0.000000e+00> : vector<8x128xf32>
    %3 = tpu.matmul %1, %2, %cst {dimension_numbers = #tpu.dot_dimension_numbers<[1], [0], [0], [1], [0, 0, 1, 1], [], []>} : vector<8x128xbf16>, vector<128x128xbf16>, vector<8x128xf32> -> vector<8x128xf32>
    %c0_3 = arith.constant 0 : index
    %c0_4 = arith.constant 0 : index
    %4 = vector.load %arg3[%c0_3, %c0_4] : memref<1x128xf32, #tpu.memory_space<vmem>>, vector<1x128xf32>
    %5 = vector.broadcast %4 : vector<1x128xf32> to vector<8x128xf32>
    %6 = arith.addf %3, %5 : vector<8x128xf32>
    %7 = math.tanh %6 : vector<8x128xf32>
    %8 = arith.truncf %7 : vector<8x128xf32> to vector<8x128xbf16>
    %c0_5 = arith.constant 0 : index
    %c0_6 = arith.constant 0 : index
    %9 = vector.load %arg4[%c0_5, %c0_6] : memref<128x128xbf16, #tpu.memory_space<vmem>>, vector<128x128xbf16>
    %cst_7 = arith.constant dense<0.000000e+00> : vector<8x128xf32>
    %10 = tpu.matmul %8, %9, %cst_7 {dimension_numbers = #tpu.dot_dimension_numbers<[1], [0], [0], [1], [0, 0, 1, 1], [], []>} : vector<8x128xbf16>, vector<128x128xbf16>, vector<8x128xf32> -> vector<8x128xf32>
    %c0_8 = arith.constant 0 : index
    %c0_9 = arith.constant 0 : index
    %11 = vector.load %arg5[%c0_8, %c0_9] : memref<1x128xf32, #tpu.memory_space<vmem>>, vector<1x128xf32>
    %12 = vector.broadcast %11 : vector<1x128xf32> to vector<8x128xf32>
    %13 = arith.addf %10, %12 : vector<8x128xf32>
    %14 = math.tanh %13 : vector<8x128xf32>
    %15 = arith.truncf %14 : vector<8x128xf32> to vector<8x128xbf16>
    %c0_10 = arith.constant 0 : index
    %c0_11 = arith.constant 0 : index
    %16 = vector.load %arg6[%c0_10, %c0_11] : memref<128x400xbf16, #tpu.memory_space<vmem>>, vector<128x400xbf16>
    %cst_12 = arith.constant dense<0.000000e+00> : vector<8x400xf32>
    %17 = tpu.matmul %15, %16, %cst_12 {dimension_numbers = #tpu.dot_dimension_numbers<[1], [0], [0], [1], [0, 0, 1, 1], [], []>} : vector<8x128xbf16>, vector<128x400xbf16>, vector<8x400xf32> -> vector<8x400xf32>
    %c0_13 = arith.constant 0 : index
    %c0_14 = arith.constant 0 : index
    %18 = vector.load %arg7[%c0_13, %c0_14] : memref<1x400xf32, #tpu.memory_space<vmem>>, vector<1x400xf32>
    %19 = vector.broadcast %18 : vector<1x400xf32> to vector<8x400xf32>
    %20 = arith.addf %17, %19 : vector<8x400xf32>
    %c0_15 = arith.constant 0 : index
    %c0_16 = arith.constant 0 : index
    %21 = vector.load %arg8[%c0_15, %c0_16] : memref<8x400xf32, #tpu.memory_space<vmem>>, vector<8x400xf32>
    tpu.vector_store %arg8[%c0_15, %c0_16], %20 {strides = array<i32>} : memref<8x400xf32, #tpu.memory_space<vmem>>, vector<8x400xf32>,
    return
  }
  func.func @transform_0(%arg0: i32) -> (i32, i32) {
    %c0_i32 = arith.constant 0 : i32
    %c0_i32_0 = arith.constant 0 : i32
    return %arg0, %c0_i32 : i32, i32
  }
  func.func @transform_1(%arg0: i32) -> (i32, i32) {
    %c0_i32 = arith.constant 0 : i32
    %c0_i32_0 = arith.constant 0 : i32
    %c0_i32_1 = arith.constant 0 : i32
    return %c0_i32, %c0_i32_0 : i32, i32
  }
  func.func @transform_2(%arg0: i32) -> (i32, i32) {
    %c0_i32 = arith.constant 0 : i32
    %c0_i32_0 = arith.constant 0 : i32
    %c0_i32_1 = arith.constant 0 : i32
    return %c0_i32, %c0_i32_0 : i32, i32
  }
  func.func @transform_3(%arg0: i32) -> (i32, i32) {
    %c0_i32 = arith.constant 0 : i32
    %c0_i32_0 = arith.constant 0 : i32
    %c0_i32_1 = arith.constant 0 : i32
    return %c0_i32, %c0_i32_0 : i32, i32
  }
  func.func @transform_4(%arg0: i32) -> (i32, i32) {
    %c0_i32 = arith.constant 0 : i32
    %c0_i32_0 = arith.constant 0 : i32
    %c0_i32_1 = arith.constant 0 : i32
    return %c0_i32, %c0_i32_0 : i32, i32
  }
  func.func @transform_5(%arg0: i32) -> (i32, i32) {
    %c0_i32 = arith.constant 0 : i32
    %c0_i32_0 = arith.constant 0 : i32
    %c0_i32_1 = arith.constant 0 : i32
    return %c0_i32, %c0_i32_0 : i32, i32
  }
  func.func @transform_6(%arg0: i32) -> (i32, i32) {
    %c0_i32 = arith.constant 0 : i32
    %c0_i32_0 = arith.constant 0 : i32
    %c0_i32_1 = arith.constant 0 : i32
    return %c0_i32, %c0_i32_0 : i32, i32
  }
  func.func @transform_7(%arg0: i32) -> (i32, i32) {
    %c0_i32 = arith.constant 0 : i32
    %c0_i32_0 = arith.constant 0 : i32
    return %arg0, %c0_i32 : i32, i32
  }
}

</mosaic_0001>

<llo_original>
// kernel: _head_fused.1
$region0: #{_head_fused.1}
  #allocation0 [shape = 'u32[]', space=smem, size = 0x4, offset = 0x4, fixed_abs, tag = 'smem constant byte address 0x4 - core index']
  #allocation1 [shape = 'u32[144,128]{1,0:T(1,128)}', space=vmem, size = 0x12000, scoped, tag = 'internal scratch']
  %s0 = inlined_call_operand.hbm [shape: f32[16,128], index: 0, kind: input, shape index: {}]
  %s1 = inlined_call_operand.hbm [shape: bf16[128,128], index: 1, kind: input, shape index: {}]
  %s2 = inlined_call_operand.hbm [shape: f32[1,128], index: 2, kind: input, shape index: {}]
  %s3 = inlined_call_operand.hbm [shape: bf16[128,128], index: 3, kind: input, shape index: {}]
  %s4 = inlined_call_operand.hbm [shape: f32[1,128], index: 4, kind: input, shape index: {}]
  %s5 = inlined_call_operand.hbm [shape: bf16[128,400], index: 5, kind: input, shape index: {}]
  %s6 = inlined_call_operand.hbm [shape: f32[1,400], index: 6, kind: input, shape index: {}]
  %s7 = inlined_call_operand.hbm [shape: f32[16,400], index: 7, kind: output, shape index: {}]
  %s8 = sld [smem:[#allocation0]]
  $region89: #{_head_fused.1} parent=0
    _
  %s10 = ssub.s32 1, %s8
  %s11 = scalar_select 0, %s10, %s8
  $region1: #{_head_fused.1} parent=0
    #allocation2 [shape = 'u8[8192]{0}', space=vmem, size = 0x2000, scoped, tag = 'input window, operand 0']
    #allocation3 [shape = 's32[2]{0}', space=sflag, size = 0x8, scoped, tag = 'scoped memory for _head_fused.1']
    #allocation4 [shape = 's32[2]{0}', space=sflag, size = 0x8, scoped, tag = 'scoped memory for _head_fused.1']
    #allocation5 [shape = 'u8[32768]{0}', space=vmem, size = 0x8000, scoped, tag = 'input window, operand 1, single buffered']
    #allocation6 [shape = 's32[1]{0}', space=sflag, size = 0x4, scoped, tag = 'scoped memory for _head_fused.1']
    #allocation7 [shape = 'u8[512]{0}', space=vmem, size = 0x400, scoped, tag = 'input window, operand 2, single buffered']
    #allocation8 [shape = 'u8[32768]{0}', space=vmem, size = 0x8000, scoped, tag = 'input window, operand 3, single buffered']
    #allocation9 [shape = 's32[1]{0}', space=sflag, size = 0x4, scoped, tag = 'scoped memory for _head_fused.1']
    #allocation10 [shape = 'u8[512]{0}', space=vmem, size = 0x400, scoped, tag = 'input window, operand 4, single buffered']
    #allocation11 [shape = 'u8[131072]{0}', space=vmem, size = 0x20000, scoped, tag = 'input window, operand 5, single buffered']
    #allocation12 [shape = 's32[1]{0}', space=sflag, size = 0x4, scoped, tag = 'scoped memory for _head_fused.1']
    #allocation13 [shape = 'u8[2048]{0}', space=vmem, size = 0x800, scoped, tag = 'input window, operand 6, single buffered']
    #allocation14 [shape = 'u8[32768]{0}', space=vmem, size = 0x8000, scoped, tag = 'output window, operand 0']
    %12 = vsyncpa [#allocation3], 0
    %s13 = scalar_lea.sflag [#allocation3], 1
    %14 = vsyncpa %s13, 0
    %15 = vsyncpa [#allocation6], 0
    %16 = vsyncpa [#allocation9], 0
    %17 = vsyncpa [#allocation12], 0
    %18 = vsyncpa [#allocation4], 0
    %s19 = scalar_lea.sflag [#allocation4], 1
    %20 = vsyncpa %s19, 0
    loop: start=0, step=1, limit=4
    $region2: #{_head_fused.1} parent=1 // loop_pre_header
      _
    $region3: #{_head_fused.1} parent=1 // loop_header
      %s22 = sphi 0, %s26
      %p23 = scmp.ge.s32.totalorder %s22, 4
      %s32 = sphi 0, %s34
      %s35 = sphi 0, %s32
      %s36 = sphi 0, %s35
      %s52 = sphi 0, %s36
      %s56 = sphi 0, %s56
      %s58 = sphi 0, %s56
      %s59 = sphi 0, %s58
      %s73 = sphi 0, %s59
      %s77 = sphi 0, %s77
      %s79 = sphi 0, %s77
      %s80 = sphi 0, %s79
      %s94 = sphi 0, %s80
      %s98 = sphi 0, %s98
      %s100 = sphi 0, %s98
      %s101 = sphi 0, %s100
      %s115 = sphi 0, %s101
      %s119 = sphi 0, %s119
      %s121 = sphi 0, %s119
      %s122 = sphi 0, %s121
      %s136 = sphi 0, %s122
      %s140 = sphi 0, %s140
      %s142 = sphi 0, %s140
      %s143 = sphi 0, %s142
      %s157 = sphi 0, %s143
      %s161 = sphi 0, %s161
      %s163 = sphi 0, %s161
      %s164 = sphi 0, %s163
      %s178 = sphi 0, %s164
      %s184 = sphi 0, %s186
      %s187 = sphi 0, %s184
      %s188 = sphi 0, %s187
      %s204 = sphi 0, %s188
    $region4: #{_head_fused.1} parent=1 // loop_header_branch
      %25 = sbr.rel (%p23) target = $region8
    $region5: #{_head_fused.1} parent=1 // loop_body
      %s27 = ssub.s32 %s22, 1
      %s28 = ssub.s32 %s22, 2
      %s29 = sadd.s32 %s22, 1
      %s30 = ssub.s32 %s22, %s29
      %p31 = scmp.eq.s32.totalorder %s30, 0
      %s33 = sadd.s32 %s32, 1
      %s34 = scalar_select %p31, %s32, %s33
      %p37 = pneg %p31
      %p38 = scmp.eq.s32.totalorder %s22, 1
      %p39 = por %p37, %p38
      %p40 = scmp.ne.s32.totalorder %s32, %s35
      %p41 = scmp.eq.s32.totalorder %s22, 0
      %p42 = por %p40, %p41
      %p43 = scmp.ne.s32.totalorder %s32, %s35
      %p44 = scmp.eq.s32.totalorder %s27, 1
      %p45 = por %p43, %p44
      %p46 = scmp.ne.s32.totalorder %s35, %s36
      %p47 = scmp.eq.s32.totalorder %s27, 0
      %p48 = por %p46, %p47
      %p49 = scmp.ne.s32.totalorder %s35, %s36
      %p50 = scmp.eq.s32.totalorder %s28, 1
      %p51 = por %p49, %p50
      %p53 = scmp.ne.s32.totalorder %s36, %s52
      %p54 = scmp.eq.s32.totalorder %s28, 0
      %p55 = por %p53, %p54
      %s57 = sadd.s32 %s56, 1
      %p60 = scmp.eq.s32.totalorder %s22, 1
      %p61 = scmp.ne.s32.totalorder %s56, %s58
      %p62 = scmp.eq.s32.totalorder %s22, 0
      %p63 = por %p61, %p62
      %p64 = scmp.ne.s32.totalorder %s56, %s58
      %p65 = scmp.eq.s32.totalorder %s27, 1
      %p66 = por %p64, %p65
      %p67 = scmp.ne.s32.totalorder %s58, %s59
      %p68 = scmp.eq.s32.totalorder %s27, 0
      %p69 = por %p67, %p68
      %p70 = scmp.ne.s32.totalorder %s58, %s59
      %p71 = scmp.eq.s32.totalorder %s28, 1
      %p72 = por %p70, %p71
      %p74 = scmp.ne.s32.totalorder %s59, %s73
      %p75 = scmp.eq.s32.totalorder %s28, 0
      %p76 = por %p74, %p75
      %s78 = sadd.s32 %s77, 1
      %p81 = scmp.eq.s32.totalorder %s22, 1
      %p82 = scmp.ne.s32.totalorder %s77, %s79
      %p83 = scmp.eq.s32.totalorder %s22, 0
      %p84 = por %p82, %p83
      %p85 = scmp.ne.s32.totalorder %s77, %s79
      %p86 = scmp.eq.s32.totalorder %s27, 1
      %p87 = por %p85, %p86
      %p88 = scmp.ne.s32.totalorder %s79, %s80
      %p89 = scmp.eq.s32.totalorder %s27, 0
      %p90 = por %p88, %p89
      %p91 = scmp.ne.s32.totalorder %s79, %s80
      %p92 = scmp.eq.s32.totalorder %s28, 1
      %p93 = por %p91, %p92
      %p95 = scmp.ne.s32.totalorder %s80, %s94
      %p96 = scmp.eq.s32.totalorder %s28, 0
      %p97 = por %p95, %p96
      %s99 = sadd.s32 %s98, 1
      %p102 = scmp.eq.s32.totalorder %s22, 1
      %p103 = scmp.ne.s32.totalorder %s98, %s100
      %p104 = scmp.eq.s32.totalorder %s22, 0
      %p105 = por %p103, %p104
      %p106 = scmp.ne.s32.totalorder %s98, %s100
      %p107 = scmp.eq.s32.totalorder %s27, 1
      %p108 = por %p106, %p107
      %p109 = scmp.ne.s32.totalorder %s100, %s101
      %p110 = scmp.eq.s32.totalorder %s27, 0
      %p111 = por %p109, %p110
      %p112 = scmp.ne.s32.totalorder %s100, %s101
      %p113 = scmp.eq.s32.totalorder %s28, 1
      %p114 = por %p112, %p113
      %p116 = scmp.ne.s32.totalorder %s101, %s115
      %p117 = scmp.eq.s32.totalorder %s28, 0
      %p118 = por %p116, %p117
      %s120 = sadd.s32 %s119, 1
      %p123 = scmp.eq.s32.totalorder %s22, 1
      %p124 = scmp.ne.s32.totalorder %s119, %s121
      %p125 = scmp.eq.s32.totalorder %s22, 0
      %p126 = por %p124, %p125
      %p127 = scmp.ne.s32.totalorder %s119, %s121
      %p128 = scmp.eq.s32.totalorder %s27, 1
      %p129 = por %p127, %p128
      %p130 = scmp.ne.s32.totalorder %s121, %s122
      %p131 = scmp.eq.s32.totalorder %s27, 0
      %p132 = por %p130, %p131
      %p133 = scmp.ne.s32.totalorder %s121, %s122
      %p134 = scmp.eq.s32.totalorder %s28, 1
      %p135 = por %p133, %p134
      %p137 = scmp.ne.s32.totalorder %s122, %s136
      %p138 = scmp.eq.s32.totalorder %s28, 0
      %p139 = por %p137, %p138
      %s141 = sadd.s32 %s140, 1
      %p144 = scmp.eq.s32.totalorder %s22, 1
      %p145 = scmp.ne.s32.totalorder %s140, %s142
      %p146 = scmp.eq.s32.totalorder %s22, 0
      %p147 = por %p145, %p146
      %p148 = scmp.ne.s32.totalorder %s140, %s142
      %p149 = scmp.eq.s32.totalorder %s27, 1
      %p150 = por %p148, %p149
      %p151 = scmp.ne.s32.totalorder %s142, %s143
      %p152 = scmp.eq.s32.totalorder %s27, 0
      %p153 = por %p151, %p152
      %p154 = scmp.ne.s32.totalorder %s142, %s143
      %p155 = scmp.eq.s32.totalorder %s28, 1
      %p156 = por %p154, %p155
      %p158 = scmp.ne.s32.totalorder %s143, %s157
      %p159 = scmp.eq.s32.totalorder %s28, 0
      %p160 = por %p158, %p159
      %s162 = sadd.s32 %s161, 1
      %p165 = scmp.eq.s32.totalorder %s22, 1
      %p166 = scmp.ne.s32.totalorder %s161, %s163
      %p167 = scmp.eq.s32.totalorder %s22, 0
      %p168 = por %p166, %p167
      %p169 = scmp.ne.s32.totalorder %s161, %s163
      %p170 = scmp.eq.s32.totalorder %s27, 1
      %p171 = por %p169, %p170
      %p172 = scmp.ne.s32.totalorder %s163, %s164
      %p173 = scmp.eq.s32.totalorder %s27, 0
      %p174 = por %p172, %p173
      %p175 = scmp.ne.s32.totalorder %s163, %s164
      %p176 = scmp.eq.s32.totalorder %s28, 1
      %p177 = por %p175, %p176
      %p179 = scmp.ne.s32.totalorder %s164, %s178
      %p180 = scmp.eq.s32.totalorder %s28, 0
      %p181 = por %p179, %p180
      %s182 = ssub.s32 %s22, %s29
      %p183 = scmp.eq.s32.totalorder %s182, 0
      %s185 = sadd.s32 %s184, 1
      %s186 = scalar_select %p183, %s184, %s185
      %p189 = pneg %p183
      %p190 = scmp.eq.s32.totalorder %s22, 1
      %p191 = por %p189, %p190
      %p192 = scmp.ne.s32.totalorder %s184, %s187
      %p193 = scmp.eq.s32.totalorder %s22, 0
      %p194 = por %p192, %p193
      %p195 = scmp.ne.s32.totalorder %s184, %s187
      %p196 = scmp.eq.s32.totalorder %s27, 1
      %p197 = por %p195, %p196
      %p198 = scmp.ne.s32.totalorder %s187, %s188
      %p199 = scmp.eq.s32.totalorder %s27, 0
      %p200 = por %p198, %p199
      %p201 = scmp.ne.s32.totalorder %s187, %s188
      %p202 = scmp.eq.s32.totalorder %s28, 1
      %p203 = por %p201, %p202
      %p205 = scmp.ne.s32.totalorder %s188, %s204
      %p206 = scmp.eq.s32.totalorder %s28, 0
      %p207 = por %p205, %p206
      %p208 = scmp.le.s32.totalorder 1, %s22
      %p209 = scmp.lt.s32.totalorder %s22, 3
      %p210 = pnand %p208, %p209
      %p211 = pneg %p210
      // Predicated region
      $region9: #{_head_fused.1} parent=5 // pred_check
        _
      $region10: #{_head_fused.1} parent=5 // pred_check_branch
        %213 = sbr.rel (%p210) target = $region12
      $region11: #{_head_fused.1} parent=5 // pred_region
        %s214 = ssub.s32 %s22, 1
        // Predicated region
        $region13: #{_head_fused.1} parent=11 // pred_check
          %p215 = pneg %p69
        $region14: #{_head_fused.1} parent=11 // pred_check_branch
          %217 = sbr.rel (%p215) target = $region16
        $region15: #{_head_fused.1} parent=11 // pred_region
          %s219 = ssub.s32 1024, 1024
          %220 = vsyncadd [#allocation6], %s219
          %s221 = sshll.u32 [#allocation5], 4
          %s222 = int_to_ptr.vmem [resolvable:$true] %s221
          %227 = dma.hbm_to_vmem [thread:$0]  %s1, 1024, %s222, [#allocation6], 64, 64, 4
        $region16: #{_head_fused.1} parent=11 // pred_fallthru
          _
        // Predicated region
        $region17: #{_head_fused.1} parent=11 // pred_check
          %p228 = pneg %p90
        $region18: #{_head_fused.1} parent=11 // pred_check_branch
          %230 = sbr.rel (%p228) target = $region20
        $region19: #{_head_fused.1} parent=11 // pred_region
          %s232 = ssub.s32 16, 16
          %233 = vsyncadd [#allocation6], %s232
          %s235 = sshll.u32 [#allocation7], 4
          %s236 = int_to_ptr.vmem [resolvable:$true] %s235
          %238 = dma.hbm_to_vmem [thread:$0]  %s2, 16, %s236, [#allocation6]
        $region20: #{_head_fused.1} parent=11 // pred_fallthru
          _
        // Predicated region
        $region21: #{_head_fused.1} parent=11 // pred_check
          %p239 = pneg %p111
        $region22: #{_head_fused.1} parent=11 // pred_check_branch
          %241 = sbr.rel (%p239) target = $region24
        $region23: #{_head_fused.1} parent=11 // pred_region
          %s243 = ssub.s32 1024, 1024
          %244 = vsyncadd [#allocation9], %s243
          %s245 = sshll.u32 [#allocation8], 4
          %s246 = int_to_ptr.vmem [resolvable:$true] %s245
          %251 = dma.hbm_to_vmem [thread:$0]  %s3, 1024, %s246, [#allocation9], 64, 64, 4
        $region24: #{_head_fused.1} parent=11 // pred_fallthru
          _
        // Predicated region
        $region25: #{_head_fused.1} parent=11 // pred_check
          %p252 = pneg %p132
        $region26: #{_head_fused.1} parent=11 // pred_check_branch
          %254 = sbr.rel (%p252) target = $region28
        $region27: #{_head_fused.1} parent=11 // pred_region
          %s256 = ssub.s32 16, 16
          %257 = vsyncadd [#allocation9], %s256
          %s259 = sshll.u32 [#allocation10], 4
          %s260 = int_to_ptr.vmem [resolvable:$true] %s259
          %262 = dma.hbm_to_vmem [thread:$0]  %s4, 16, %s260, [#allocation9]
        $region28: #{_head_fused.1} parent=11 // pred_fallthru
          _
        // Predicated region
        $region29: #{_head_fused.1} parent=11 // pred_check
          %p263 = pneg %p153
        $region30: #{_head_fused.1} parent=11 // pred_check_branch
          %265 = sbr.rel (%p263) target = $region32
        $region31: #{_head_fused.1} parent=11 // pred_region
          %s267 = ssub.s32 4096, 4096
          %268 = vsyncadd [#allocation12], %s267
          %s269 = sshll.u32 [#allocation11], 4
          %s270 = int_to_ptr.vmem [resolvable:$true] %s269
          %275 = dma.hbm_to_vmem [thread:$0]  %s5, 4096, %s270, [#allocation12], 256, 256, 16
        $region32: #{_head_fused.1} parent=11 // pred_fallthru
          _
        // Predicated region
        $region33: #{_head_fused.1} parent=11 // pred_check
          %p276 = pneg %p174
        $region34: #{_head_fused.1} parent=11 // pred_check_branch
          %278 = sbr.rel (%p276) target = $region36
        $region35: #{_head_fused.1} parent=11 // pred_region
          %s280 = ssub.s32 64, 64
          %281 = vsyncadd [#allocation12], %s280
          %s283 = sshll.u32 [#allocation13], 4
          %s284 = int_to_ptr.vmem [resolvable:$true] %s283
          %286 = dma.hbm_to_vmem [thread:$0]  %s6, 64, %s284, [#allocation12]
        $region36: #{_head_fused.1} parent=11 // pred_fallthru
          _
      $region12: #{_head_fused.1} parent=5 // pred_fallthru
        _
      %p287 = scmp.lt.s32.totalorder %s22, 2
      // Predicated region
      $region37: #{_head_fused.1} parent=5 // pred_check
        %p288 = pneg %p287
      $region38: #{_head_fused.1} parent=5 // pred_check_branch
        %290 = sbr.rel (%p288) target = $region40
      $region39: #{_head_fused.1} parent=5 // pred_region
        // Predicated region
        $region41: #{_head_fused.1} parent=39 // pred_check
          %p291 = pneg %p42
        $region42: #{_head_fused.1} parent=39 // pred_check_branch
          %293 = sbr.rel (%p291) target = $region44
        $region43: #{_head_fused.1} parent=39 // pred_region
          %s294 = sand.u32 %s32, 1
          %s295 = scalar_lea.sflag [#allocation3], %s294
          %s296 = sand.u32 %s32, 1
          %s297 = smul.addr %s296, 8
          %s298 = scalar_lea.vmem [#allocation2], %s297
          %s300 = ssub.s32 128, 128
          %301 = vsyncadd %s295, %s300
          %s302 = smul.addr %s22, 128
          %s303 = scalar_lea.hbm %s0, %s302
          %s305 = sshll.u32 %s298, 4
          %s306 = int_to_ptr.vmem [resolvable:$true] %s305
          %308 = dma.hbm_to_vmem [thread:$0]  %s303, 128, %s306, %s295
        $region44: #{_head_fused.1} parent=39 // pred_fallthru
          _
      $region40: #{_head_fused.1} parent=5 // pred_fallthru
        _
      %p309 = scmp.le.s32.totalorder 1, %s22
      %p310 = scmp.lt.s32.totalorder %s22, 3
      %p311 = pnand %p309, %p310
      %p312 = pneg %p311
      // Predicated region
      $region45: #{_head_fused.1} parent=5 // pred_check
        _
      $region46: #{_head_fused.1} parent=5 // pred_check_branch
        %314 = sbr.rel (%p311) target = $region48
      $region47: #{_head_fused.1} parent=5 // pred_region
        %s315 = ssub.s32 %s22, 1
        %s316 = sand.u32 %s35, 1
        %s317 = scalar_lea.sflag [#allocation3], %s316
        %s318 = sand.u32 %s35, 1
        %s319 = smul.addr %s318, 8
        %s320 = scalar_lea.vmem [#allocation2], %s319
        // Predicated region
        $region49: #{_head_fused.1} parent=47 // pred_check
          %p321 = pneg %p48
        $region50: #{_head_fused.1} parent=47 // pred_check_branch
          %323 = sbr.rel (%p321) target = $region52
        $region51: #{_head_fused.1} parent=47 // pred_region
          %324 = dma.done %s317, 128
        $region52: #{_head_fused.1} parent=47 // pred_fallthru
          _
        // Predicated region
        $region53: #{_head_fused.1} parent=47 // pred_check
          %p325 = pneg %p69
        $region54: #{_head_fused.1} parent=47 // pred_check_branch
          %327 = sbr.rel (%p325) target = $region56
        $region55: #{_head_fused.1} parent=47 // pred_region
          %328 = dma.done [#allocation6], 1024
        $region56: #{_head_fused.1} parent=47 // pred_fallthru
          _
        // Predicated region
        $region57: #{_head_fused.1} parent=47 // pred_check
          %p329 = pneg %p90
        $region58: #{_head_fused.1} parent=47 // pred_check_branch
          %331 = sbr.rel (%p329) target = $region60
        $region59: #{_head_fused.1} parent=47 // pred_region
          %332 = dma.done [#allocation6], 16
        $region60: #{_head_fused.1} parent=47 // pred_fallthru
          _
        // Predicated region
        $region61: #{_head_fused.1} parent=47 // pred_check
          %p333 = pneg %p111
        $region62: #{_head_fused.1} parent=47 // pred_check_branch
          %335 = sbr.rel (%p333) target = $region64
        $region63: #{_head_fused.1} parent=47 // pred_region
          %336 = dma.done [#allocation9], 1024
        $region64: #{_head_fused.1} parent=47 // pred_fallthru
          _
        // Predicated region
        $region65: #{_head_fused.1} parent=47 // pred_check
          %p337 = pneg %p132
        $region66: #{_head_fused.1} parent=47 // pred_check_branch
          %339 = sbr.rel (%p337) target = $region68
        $region67: #{_head_fused.1} parent=47 // pred_region
          %340 = dma.done [#allocation9], 16
        $region68: #{_head_fused.1} parent=47 // pred_fallthru
          _
        // Predicated region
        $region69: #{_head_fused.1} parent=47 // pred_check
          %p341 = pneg %p153
        $region70: #{_head_fused.1} parent=47 // pred_check_branch
          %343 = sbr.rel (%p341) target = $region72
        $region71: #{_head_fused.1} parent=47 // pred_region
          %344 = dma.done [#allocation12], 4096
        $region72: #{_head_fused.1} parent=47 // pred_fallthru
          _
        // Predicated region
        $region73: #{_head_fused.1} parent=47 // pred_check
          %p345 = pneg %p174
        $region74: #{_head_fused.1} parent=47 // pred_check_branch
          %347 = sbr.rel (%p345) target = $region76
        $region75: #{_head_fused.1} parent=47 // pred_region
          %348 = dma.done [#allocation12], 64
        $region76: #{_head_fused.1} parent=47 // pred_fallthru
          _
        %s349 = sand.u32 %s35, 1
        %s350 = scalar_lea.sflag [#allocation3], %s349
        %s351 = sand.u32 %s35, 1
        %s352 = smul.addr %s351, 8
        %s353 = scalar_lea.vmem [#allocation2], %s352
        %p354 = pneg %p48
        %p355 = pneg %p45
        %p356 = pneg %p69
        %p357 = pneg %p66
        %p358 = pneg %p90
        %p359 = pneg %p87
        %p360 = pneg %p111
        %p361 = pneg %p108
        %p362 = pneg %p132
        %p363 = pneg %p129
        %p364 = pneg %p153
        %p365 = pneg %p150
        %p366 = pneg %p174
        %p367 = pneg %p171
        %p368 = pneg %p200
        %p369 = pneg %p197
        %s370 = sand.u32 %s187, 1
        %s371 = scalar_lea.sflag [#allocation4], %s370
        %s372 = sand.u32 %s187, 1
        %s373 = smul.addr %s372, 32
        %s374 = scalar_lea.vmem [#allocation14], %s373
        %v376 = vld [vmem:[%s320] sm:$0xff]
        %v377 = vpack.c.bf16 %v376, %v376
        %v378 = vld [vmem:[#allocation5] sm:$0xf]
        %v379 = vld [vmem:[#allocation5 + $0x4] sm:$0xf]
        %v380 = vld [vmem:[#allocation5 + $0x8] sm:$0xf]
        %v381 = vld [vmem:[#allocation5 + $0xc] sm:$0xf]
        %v382 = vld [vmem:[#allocation5 + $0x10] sm:$0xf]
        %v383 = vld [vmem:[#allocation5 + $0x14] sm:$0xf]
        %v384 = vld [vmem:[#allocation5 + $0x18] sm:$0xf]
        %v385 = vld [vmem:[#allocation5 + $0x1c] sm:$0xf]
        %v386 = vld [vmem:[#allocation5 + $0x20] sm:$0xf]
        %v387 = vld [vmem:[#allocation5 + $0x24] sm:$0xf]
        %v388 = vld [vmem:[#allocation5 + $0x28] sm:$0xf]
        %v389 = vld [vmem:[#allocation5 + $0x2c] sm:$0xf]
        %v390 = vld [vmem:[#allocation5 + $0x30] sm:$0xf]
        %v391 = vld [vmem:[#allocation5 + $0x34] sm:$0xf]
        %v392 = vld [vmem:[#allocation5 + $0x38] sm:$0xf]
        %v393 = vld [vmem:[#allocation5 + $0x3c] sm:$0xf]
        %v394 = vld [vmem:[#allocation7] sm:$0x1]
        %v396 = vlaneseq
        %v397 = vshrl.u32 %v396, 7
        %v398 = vsub.s32 0, %v397
        %v399 = vrot.slane %v394, %v398
        %v417 = vunpack.c.l.b16 %v378
        %v418 = vunpack.c.l.b16 %v379
        %v419 = vunpack.c.l.b16 %v380
        %v420 = vunpack.c.l.b16 %v381
        %v421 = vunpack.c.l.b16 %v382
        %v422 = vunpack.c.l.b16 %v383
        %v423 = vunpack.c.l.b16 %v384
        %v424 = vunpack.c.l.b16 %v385
        %v425 = vunpack.c.l.b16 %v386
        %v426 = vunpack.c.l.b16 %v387
        %v427 = vunpack.c.l.b16 %v388
        %v428 = vunpack.c.l.b16 %v389
        %v429 = vunpack.c.l.b16 %v390
        %v430 = vunpack.c.l.b16 %v391
        %v431 = vunpack.c.l.b16 %v392
        %v432 = vunpack.c.l.b16 %v393
        %v433 = vpack.c.b16 %v418, %v417
        %v434 = vpack.c.b16 %v420, %v419
        %v435 = vpack.c.b16 %v422, %v421
        %v436 = vpack.c.b16 %v424, %v423
        %v437 = vpack.c.b16 %v426, %v425
        %v438 = vpack.c.b16 %v428, %v427
        %v439 = vpack.c.b16 %v430, %v429
        %v440 = vpack.c.b16 %v432, %v431
        %449 = vmatprep.subr.bf16.mxu0 0
        %450 = vmatpush1.bf16.msra.mxu0 %v433
        %451 = vmatprep.subr.bf16.mxu0 0
        %452 = vmatpush1.bf16.msra.mxu0 %v434
        %453 = vmatprep.subr.bf16.mxu0 0
        %454 = vmatpush1.bf16.msra.mxu0 %v435
        %455 = vmatprep.subr.bf16.mxu0 0
        %456 = vmatpush1.bf16.msra.mxu0 %v436
        %457 = vmatprep.subr.bf16.mxu0 0
        %458 = vmatpush1.bf16.msra.mxu0 %v437
        %459 = vmatprep.subr.bf16.mxu0 0
        %460 = vmatpush1.bf16.msra.mxu0 %v438
        %461 = vmatprep.subr.bf16.mxu0 0
        %462 = vmatpush1.bf16.msra.mxu0 %v439
        %463 = vmatprep.subr.bf16.mxu0 0
        %464 = vmatpush1.bf16.msra.mxu0 %v440
        %465 = vmatprep.subr.bf16.mxu0 0
        %466 = vmatpush1.bf16.msra.mxu0 0
        %467 = vmatprep.subr.bf16.mxu0 0
        %468 = vmatpush1.bf16.msra.mxu0 0
        %469 = vmatprep.subr.bf16.mxu0 0
        %470 = vmatpush1.bf16.msra.mxu0 0
        %471 = vmatprep.subr.bf16.mxu0 0
        %472 = vmatpush1.bf16.msra.mxu0 0
        %473 = vmatprep.subr.bf16.mxu0 0
        %474 = vmatpush1.bf16.msra.mxu0 0
        %475 = vmatprep.subr.bf16.mxu0 0
        %476 = vmatpush1.bf16.msra.mxu0 0
        %477 = vmatprep.subr.bf16.mxu0 0
        %478 = vmatpush1.bf16.msra.mxu0 0
        %479 = vmatprep.subr.bf16.mxu0 0
        %480 = vmatpush1.bf16.msra.mxu0 0
        %481 = vmatprep.mubr.bf16.mxu0 0
        %482 = vmatmul.mubr.bf16.gmra.mrb[0].mxu0 %v377
        %v483 = vpop.f32.mrb[0].mxu0
        %v484 = vadd.f32 %v399, %v483
        %v485 = vpop.f32.mrb[0].mxu0
        %v486 = vpop.f32.mrb[0].mxu0
        %v487 = vpop.f32.mrb[0].mxu0
        %488 = vdwg.mxu0
        %v489 = vtanh.pop %v484
        %v490 = vpack.c.bf16 %v489, %v489
        %v491 = vld [vmem:[#allocation8] sm:$0xf]
        %v492 = vld [vmem:[#allocation8 + $0x4] sm:$0xf]
        %v493 = vld [vmem:[#allocation8 + $0x8] sm:$0xf]
        %v494 = vld [vmem:[#allocation8 + $0xc] sm:$0xf]
        %v495 = vld [vmem:[#allocation8 + $0x10] sm:$0xf]
        %v496 = vld [vmem:[#allocation8 + $0x14] sm:$0xf]
        %v497 = vld [vmem:[#allocation8 + $0x18] sm:$0xf]
        %v498 = vld [vmem:[#allocation8 + $0x1c] sm:$0xf]
        %v499 = vld [vmem:[#allocation8 + $0x20] sm:$0xf]
        %v500 = vld [vmem:[#allocation8 + $0x24] sm:$0xf]
        %v501 = vld [vmem:[#allocation8 + $0x28] sm:$0xf]
        %v502 = vld [vmem:[#allocation8 + $0x2c] sm:$0xf]
        %v503 = vld [vmem:[#allocation8 + $0x30] sm:$0xf]
        %v504 = vld [vmem:[#allocation8 + $0x34] sm:$0xf]
        %v505 = vld [vmem:[#allocation8 + $0x38] sm:$0xf]
        %v506 = vld [vmem:[#allocation8 + $0x3c] sm:$0xf]
        %v507 = vld [vmem:[#allocation10] sm:$0x1]
        %v509 = vlaneseq
        %v510 = vshrl.u32 %v509, 7
        %v511 = vsub.s32 0, %v510
        %v512 = vrot.slane %v507, %v511
        %v530 = vunpack.c.l.b16 %v491
        %v531 = vunpack.c.l.b16 %v492
        %v532 = vunpack.c.l.b16 %v493
        %v533 = vunpack.c.l.b16 %v494
        %v534 = vunpack.c.l.b16 %v495
        %v535 = vunpack.c.l.b16 %v496
        %v536 = vunpack.c.l.b16 %v497
        %v537 = vunpack.c.l.b16 %v498
        %v538 = vunpack.c.l.b16 %v499
        %v539 = vunpack.c.l.b16 %v500
        %v540 = vunpack.c.l.b16 %v501
        %v541 = vunpack.c.l.b16 %v502
        %v542 = vunpack.c.l.b16 %v503
        %v543 = vunpack.c.l.b16 %v504
        %v544 = vunpack.c.l.b16 %v505
        %v545 = vunpack.c.l.b16 %v506
        %v546 = vpack.c.b16 %v531, %v530
        %v547 = vpack.c.b16 %v533, %v532
        %v548 = vpack.c.b16 %v535, %v534
        %v549 = vpack.c.b16 %v537, %v536
        %v550 = vpack.c.b16 %v539, %v538
        %v551 = vpack.c.b16 %v541, %v540
        %v552 = vpack.c.b16 %v543, %v542
        %v553 = vpack.c.b16 %v545, %v544
        %562 = vmatprep.subr.bf16.mxu0 0
        %563 = vmatpush1.bf16.msra.mxu0 %v546
        %564 = vmatprep.subr.bf16.mxu0 0
        %565 = vmatpush1.bf16.msra.mxu0 %v547
        %566 = vmatprep.subr.bf16.mxu0 0
        %567 = vmatpush1.bf16.msra.mxu0 %v548
        %568 = vmatprep.subr.bf16.mxu0 0
        %569 = vmatpush1.bf16.msra.mxu0 %v549
        %570 = vmatprep.subr.bf16.mxu0 0
        %571 = vmatpush1.bf16.msra.mxu0 %v550
        %572 = vmatprep.subr.bf16.mxu0 0
        %573 = vmatpush1.bf16.msra.mxu0 %v551
        %574 = vmatprep.subr.bf16.mxu0 0
        %575 = vmatpush1.bf16.msra.mxu0 %v552
        %576 = vmatprep.subr.bf16.mxu0 0
        %577 = vmatpush1.bf16.msra.mxu0 %v553
        %578 = vmatprep.subr.bf16.mxu0 0
        %579 = vmatpush1.bf16.msra.mxu0 0
        %580 = vmatprep.subr.bf16.mxu0 0
        %581 = vmatpush1.bf16.msra.mxu0 0
        %582 = vmatprep.subr.bf16.mxu0 0
        %583 = vmatpush1.bf16.msra.mxu0 0
        %584 = vmatprep.subr.bf16.mxu0 0
        %585 = vmatpush1.bf16.msra.mxu0 0
        %586 = vmatprep.subr.bf16.mxu0 0
        %587 = vmatpush1.bf16.msra.mxu0 0
        %588 = vmatprep.subr.bf16.mxu0 0
        %589 = vmatpush1.bf16.msra.mxu0 0
        %590 = vmatprep.subr.bf16.mxu0 0
        %591 = vmatpush1.bf16.msra.mxu0 0
        %592 = vmatprep.subr.bf16.mxu0 0
        %593 = vmatpush1.bf16.msra.mxu0 0
        %594 = vmatprep.mubr.bf16.mxu0 0
        %595 = vmatmul.mubr.bf16.gmra.mrb[0].mxu0 %v490
        %v596 = vpop.f32.mrb[0].mxu0
        %v597 = vadd.f32 %v512, %v596
        %v598 = vpop.f32.mrb[0].mxu0
        %v599 = vpop.f32.mrb[0].mxu0
        %v600 = vpop.f32.mrb[0].mxu0
        %601 = vdwg.mxu0
        %v602 = vtanh.pop %v597
        %v603 = vpack.c.bf16 %v602, %v602
        %v604 = vld [vmem:[#allocation11] sm:$0xff]
        %v605 = vld [vmem:[#allocation11 + $0x8] sm:$0xff]
        %v606 = vld [vmem:[#allocation11 + $0x10] sm:$0xff]
        %v607 = vld [vmem:[#allocation11 + $0x18] sm:$0xff]
        %v608 = vld [vmem:[#allocation11 + $0x20] sm:$0xff]
        %v609 = vld [vmem:[#allocation11 + $0x28] sm:$0xff]
        %v610 = vld [vmem:[#allocation11 + $0x30] sm:$0xff]
        %v611 = vld [vmem:[#allocation11 + $0x38] sm:$0xff]
        %v612 = vld [vmem:[#allocation11 + $0x40] sm:$0xff]
        %v613 = vld [vmem:[#allocation11 + $0x48] sm:$0xff]
        %v614 = vld [vmem:[#allocation11 + $0x50] sm:$0xff]
        %v615 = vld [vmem:[#allocation11 + $0x58] sm:$0xff]
        %v616 = vld [vmem:[#allocation11 + $0x60] sm:$0xff]
        %v617 = vld [vmem:[#allocation11 + $0x68] sm:$0xff]
        %v618 = vld [vmem:[#allocation11 + $0x70] sm:$0xff]
        %v619 = vld [vmem:[#allocation11 + $0x78] sm:$0xff]
        %v620 = vld [vmem:[#allocation11 + $0x80] sm:$0xff]
        %v621 = vld [vmem:[#allocation11 + $0x88] sm:$0xff]
        %v622 = vld [vmem:[#allocation11 + $0x90] sm:$0xff]
        %v623 = vld [vmem:[#allocation11 + $0x98] sm:$0xff]
        %v624 = vld [vmem:[#allocation11 + $0xa0] sm:$0xff]
        %v625 = vld [vmem:[#allocation11 + $0xa8] sm:$0xff]
        %v626 = vld [vmem:[#allocation11 + $0xb0] sm:$0xff]
        %v627 = vld [vmem:[#allocation11 + $0xb8] sm:$0xff]
        %v628 = vld [vmem:[#allocation11 + $0xc0] sm:$0xff]
        %v629 = vld [vmem:[#allocation11 + $0xc8] sm:$0xff]
        %v630 = vld [vmem:[#allocation11 + $0xd0] sm:$0xff]
        %v631 = vld [vmem:[#allocation11 + $0xd8] sm:$0xff]
        %v632 = vld [vmem:[#allocation11 + $0xe0] sm:$0xff]
        %v633 = vld [vmem:[#allocation11 + $0xe8] sm:$0xff]
        %v634 = vld [vmem:[#allocation11 + $0xf0] sm:$0xff]
        %v635 = vld [vmem:[#allocation11 + $0xf8] sm:$0xff]
        %v636 = vld [vmem:[#allocation13] sm:$0xf]
        %v638 = vlaneseq
        %v639 = vshrl.u32 %v638, 7
        %v640 = vsub.s32 0, %v639
        %v641 = vrot.slane %v636, %v640
        %v642 = vlaneseq
        %v643 = vshrl.u32 %v642, 7
        %v644 = vsub.s32 1, %v643
        %v645 = vrot.slane %v636, %v644
        %v646 = vlaneseq
        %v647 = vshrl.u32 %v646, 7
        %v648 = vsub.s32 2, %v647
        %v649 = vrot.slane %v636, %v648
        %v650 = vlaneseq
        %v651 = vshrl.u32 %v650, 7
        %v652 = vsub.s32 3, %v651
        %v653 = vrot.slane %v636, %v652
        %v690 = vunpack.c.l.b16 %v604
        %v691 = vunpack.c.h.b16 %v604
        %v692 = vunpack.c.l.b16 %v605
        %v693 = vunpack.c.h.b16 %v605
        %v694 = vunpack.c.l.b16 %v606
        %v695 = vunpack.c.h.b16 %v606
        %v696 = vunpack.c.l.b16 %v607
        %v697 = vunpack.c.h.b16 %v607
        %v698 = vunpack.c.l.b16 %v608
        %v699 = vunpack.c.h.b16 %v608
        %v700 = vunpack.c.l.b16 %v609
        %v701 = vunpack.c.h.b16 %v609
        %v702 = vunpack.c.l.b16 %v610
        %v703 = vunpack.c.h.b16 %v610
        %v704 = vunpack.c.l.b16 %v611
        %v705 = vunpack.c.h.b16 %v611
        %v706 = vunpack.c.l.b16 %v612
        %v707 = vunpack.c.h.b16 %v612
        %v708 = vunpack.c.l.b16 %v613
        %v709 = vunpack.c.h.b16 %v613
        %v710 = vunpack.c.l.b16 %v614
        %v711 = vunpack.c.h.b16 %v614
        %v712 = vunpack.c.l.b16 %v615
        %v713 = vunpack.c.h.b16 %v615
        %v714 = vunpack.c.l.b16 %v616
        %v715 = vunpack.c.h.b16 %v616
        %v716 = vunpack.c.l.b16 %v617
        %v717 = vunpack.c.h.b16 %v617
        %v718 = vunpack.c.l.b16 %v618
        %v719 = vunpack.c.h.b16 %v618
        %v720 = vunpack.c.l.b16 %v619
        %v721 = vunpack.c.h.b16 %v619
        %v722 = vunpack.c.l.b16 %v620
        %v723 = vunpack.c.h.b16 %v620
        %v724 = vunpack.c.l.b16 %v621
        %v725 = vunpack.c.h.b16 %v621
        %v726 = vunpack.c.l.b16 %v622
        %v727 = vunpack.c.h.b16 %v622
        %v728 = vunpack.c.l.b16 %v623
        %v729 = vunpack.c.h.b16 %v623
        %v730 = vunpack.c.l.b16 %v624
        %v731 = vunpack.c.h.b16 %v624
        %v732 = vunpack.c.l.b16 %v625
        %v733 = vunpack.c.h.b16 %v625
        %v734 = vunpack.c.l.b16 %v626
        %v735 = vunpack.c.h.b16 %v626
        %v736 = vunpack.c.l.b16 %v627
        %v737 = vunpack.c.h.b16 %v627
        %v738 = vunpack.c.l.b16 %v628
        %v739 = vunpack.c.h.b16 %v628
        %v740 = vunpack.c.l.b16 %v629
        %v741 = vunpack.c.h.b16 %v629
        %v742 = vunpack.c.l.b16 %v630
        %v743 = vunpack.c.h.b16 %v630
        %v744 = vunpack.c.l.b16 %v631
        %v745 = vunpack.c.h.b16 %v631
        %v746 = vunpack.c.l.b16 %v632
        %v747 = vunpack.c.h.b16 %v632
        %v748 = vunpack.c.l.b16 %v633
        %v749 = vunpack.c.h.b16 %v633
        %v750 = vunpack.c.l.b16 %v634
        %v751 = vunpack.c.h.b16 %v634
        %v752 = vunpack.c.l.b16 %v635
        %v753 = vunpack.c.h.b16 %v635
        %v754 = vpack.c.b16 %v694, %v690
        %v755 = vpack.c.b16 %v695, %v691
        %v756 = vpack.c.b16 %v696, %v692
        %v757 = vpack.c.b16 %v697, %v693
        %v758 = vpack.c.b16 %v702, %v698
        %v759 = vpack.c.b16 %v703, %v699
        %v760 = vpack.c.b16 %v704, %v700
        %v761 = vpack.c.b16 %v705, %v701
        %v762 = vpack.c.b16 %v710, %v706
        %v763 = vpack.c.b16 %v711, %v707
        %v764 = vpack.c.b16 %v712, %v708
        %v765 = vpack.c.b16 %v713, %v709
        %v766 = vpack.c.b16 %v718, %v714
        %v767 = vpack.c.b16 %v719, %v715
        %v768 = vpack.c.b16 %v720, %v716
        %v769 = vpack.c.b16 %v721, %v717
        %v770 = vpack.c.b16 %v726, %v722
        %v771 = vpack.c.b16 %v727, %v723
        %v772 = vpack.c.b16 %v728, %v724
        %v773 = vpack.c.b16 %v729, %v725
        %v774 = vpack.c.b16 %v734, %v730
        %v775 = vpack.c.b16 %v735, %v731
        %v776 = vpack.c.b16 %v736, %v732
        %v777 = vpack.c.b16 %v737, %v733
        %v778 = vpack.c.b16 %v742, %v738
        %v779 = vpack.c.b16 %v743, %v739
        %v780 = vpack.c.b16 %v744, %v740
        %v781 = vpack.c.b16 %v745, %v741
        %v782 = vpack.c.b16 %v750, %v746
        %v783 = vpack.c.b16 %v751, %v747
        %v784 = vpack.c.b16 %v752, %v748
        %v785 = vpack.c.b16 %v753, %v749
        %818 = vmatprep.subr.bf16.mxu0 %v755
        %819 = vmatpush1.bf16.msra.mxu0 %v754
        %820 = vmatprep.subr.bf16.mxu0 %v759
        %821 = vmatpush1.bf16.msra.mxu0 %v758
        %822 = vmatprep.subr.bf16.mxu0 %v763
        %823 = vmatpush1.bf16.msra.mxu0 %v762
        %824 = vmatprep.subr.bf16.mxu0 %v767
        %825 = vmatpush1.bf16.msra.mxu0 %v766
        %826 = vmatprep.subr.bf16.mxu0 %v771
        %827 = vmatpush1.bf16.msra.mxu0 %v770
        %828 = vmatprep.subr.bf16.mxu0 %v775
        %829 = vmatpush1.bf16.msra.mxu0 %v774
        %830 = vmatprep.subr.bf16.mxu0 %v779
        %831 = vmatpush1.bf16.msra.mxu0 %v778
        %832 = vmatprep.subr.bf16.mxu0 %v783
        %833 = vmatpush1.bf16.msra.mxu0 %v782
        %834 = vmatprep.subr.bf16.mxu0 0
        %835 = vmatpush1.bf16.msra.mxu0 0
        %836 = vmatprep.subr.bf16.mxu0 0
        %837 = vmatpush1.bf16.msra.mxu0 0
        %838 = vmatprep.subr.bf16.mxu0 0
        %839 = vmatpush1.bf16.msra.mxu0 0
        %840 = vmatprep.subr.bf16.mxu0 0
        %841 = vmatpush1.bf16.msra.mxu0 0
        %842 = vmatprep.subr.bf16.mxu0 0
        %843 = vmatpush1.bf16.msra.mxu0 0
        %844 = vmatprep.subr.bf16.mxu0 0
        %845 = vmatpush1.bf16.msra.mxu0 0
        %846 = vmatprep.subr.bf16.mxu0 0
        %847 = vmatpush1.bf16.msra.mxu0 0
        %848 = vmatprep.subr.bf16.mxu0 0
        %849 = vmatpush1.bf16.msra.mxu0 0
        %850 = vmatprep.mubr.bf16.mxu0 0
        %851 = vmatmul.mubr.bf16.gmra.mrb[0].mxu0 %v603
        %v852 = vpop.f32.mrb[0].mxu0
        %v853 = vadd.f32 %v641, %v852
        %v854 = vpop.f32.mrb[0].mxu0
        %v855 = vadd.f32 %v645, %v854
        %v856 = vpop.f32.mrb[0].mxu0
        %v857 = vpop.f32.mrb[0].mxu0
        %858 = vdwg.mxu0
        %859 = vmatprep.subr.bf16.mxu0 %v757
        %860 = vmatpush1.bf16.msra.mxu0 %v756
        %861 = vmatprep.subr.bf16.mxu0 %v761
        %862 = vmatpush1.bf16.msra.mxu0 %v760
        %863 = vmatprep.subr.bf16.mxu0 %v765
        %864 = vmatpush1.bf16.msra.mxu0 %v764
        %865 = vmatprep.subr.bf16.mxu0 %v769
        %866 = vmatpush1.bf16.msra.mxu0 %v768
        %867 = vmatprep.subr.bf16.mxu0 %v773
        %868 = vmatpush1.bf16.msra.mxu0 %v772
        %869 = vmatprep.subr.bf16.mxu0 %v777
        %870 = vmatpush1.bf16.msra.mxu0 %v776
        %871 = vmatprep.subr.bf16.mxu0 %v781
        %872 = vmatpush1.bf16.msra.mxu0 %v780
        %873 = vmatprep.subr.bf16.mxu0 %v785
        %874 = vmatpush1.bf16.msra.mxu0 %v784
        %875 = vmatprep.subr.bf16.mxu0 0
        %876 = vmatpush1.bf16.msra.mxu0 0
        %877 = vmatprep.subr.bf16.mxu0 0
        %878 = vmatpush1.bf16.msra.mxu0 0
        %879 = vmatprep.subr.bf16.mxu0 0
        %880 = vmatpush1.bf16.msra.mxu0 0
        %881 = vmatprep.subr.bf16.mxu0 0
        %882 = vmatpush1.bf16.msra.mxu0 0
        %883 = vmatprep.subr.bf16.mxu0 0
        %884 = vmatpush1.bf16.msra.mxu0 0
        %885 = vmatprep.subr.bf16.mxu0 0
        %886 = vmatpush1.bf16.msra.mxu0 0
        %887 = vmatprep.subr.bf16.mxu0 0
        %888 = vmatpush1.bf16.msra.mxu0 0
        %889 = vmatprep.subr.bf16.mxu0 0
        %890 = vmatpush1.bf16.msra.mxu0 0
        %891 = vmatprep.mubr.bf16.mxu0 0
        %892 = vmatmul.mubr.bf16.gmra.mrb[0].mxu0 %v603
        %v893 = vpop.f32.mrb[0].mxu0
        %v894 = vadd.f32 %v649, %v893
        %v895 = vpop.f32.mrb[0].mxu0
        %v896 = vadd.f32 %v653, %v895
        %v897 = vpop.f32.mrb[0].mxu0
        %v898 = vpop.f32.mrb[0].mxu0
        %899 = vdwg.mxu0
        %900 = vst [vmem:[%s374] sm:$0xff] %v853
        %901 = vst [vmem:[%s374 + $0x8] sm:$0xff] %v855
        %902 = vst [vmem:[%s374 + $0x10] sm:$0xff] %v894
        %vm903 = vcmask 130048
        %904 = vst.msk [vmem:[%s374 + $0x18] sm:$0xff] %vm903, %v896
        %s905 = sand.u32 %s187, 1
        %s906 = scalar_lea.sflag [#allocation4], %s905
        %s907 = sand.u32 %s187, 1
        %s908 = smul.addr %s907, 32
        %s909 = scalar_lea.vmem [#allocation14], %s908
        // Predicated region
        $region77: #{_head_fused.1} parent=47 // pred_check
          %p910 = pneg %p197
        $region78: #{_head_fused.1} parent=47 // pred_check_branch
          %912 = sbr.rel (%p910) target = $region80
        $region79: #{_head_fused.1} parent=47 // pred_region
          %s914 = ssub.s32 512, 512
          %915 = vsyncadd %s906, %s914
          %s916 = smul.addr %s27, 4
          %s917 = smul.addr %s916, 128
          %s918 = scalar_lea.hbm %s7, %s917
          %s920 = sshll.u32 %s909, 4
          %s921 = int_to_ptr.vmem [resolvable:$true] %s920
          %923 = dma.vmem_to_hbm [thread:$0]  %s921, 512, %s918, %s906
        $region80: #{_head_fused.1} parent=47 // pred_fallthru
          _
      $region48: #{_head_fused.1} parent=5 // pred_fallthru
        _
      %p924 = scmp.le.s32.totalorder 2, %s22
      // Predicated region
      $region81: #{_head_fused.1} parent=5 // pred_check
        %p925 = pneg %p924
      $region82: #{_head_fused.1} parent=5 // pred_check_branch
        %927 = sbr.rel (%p925) target = $region84
      $region83: #{_head_fused.1} parent=5 // pred_region
        %s928 = ssub.s32 %s22, 2
        // Predicated region
        $region85: #{_head_fused.1} parent=83 // pred_check
          %p929 = pneg %p203
        $region86: #{_head_fused.1} parent=83 // pred_check_branch
          %931 = sbr.rel (%p929) target = $region88
        $region87: #{_head_fused.1} parent=83 // pred_region
          %s932 = sand.u32 %s188, 1
          %s933 = scalar_lea.sflag [#allocation4], %s932
          %s934 = sand.u32 %s188, 1
          %s935 = smul.addr %s934, 32
          %s936 = scalar_lea.vmem [#allocation14], %s935
          %937 = dma.done %s933, 512
        $region88: #{_head_fused.1} parent=83 // pred_fallthru
          _
      $region84: #{_head_fused.1} parent=5 // pred_fallthru
        _
    $region6: #{_head_fused.1} parent=1 // loop_footer
      %s26 = sadd.s32 1, %s22
    $region7: #{_head_fused.1} parent=1 // loop_footer_branch
      %21 = sbr.rel target = $region3
    $region8: #{_head_fused.1} parent=1 // loop_exit
      _
    %938 = vsyncpa [#allocation3], 1
    %s939 = scalar_lea.sflag [#allocation3], 1
    %940 = vsyncpa %s939, 1
    %941 = vsyncpa [#allocation6], 1
    %942 = vsyncpa [#allocation9], 1
    %943 = vsyncpa [#allocation12], 1
    %944 = vsyncpa [#allocation4], 1
    %s945 = scalar_lea.sflag [#allocation4], 1
    %946 = vsyncpa %s945, 1

</llo_original>
